<compile_context>
chip_gen: v7x
topology: tpu7x:2x2x1
jax: 0.10.0
libtpu: 0.0.40
codegen_flags: <defaults>
</compile_context>

<pallas_src>
import functools

import jax
import jax.numpy as jnp
from jax import lax
from jax.experimental import pallas as pl
from jax.experimental.pallas import tpu as pltpu


def _round_up(x, m):
    return (x + m - 1) // m * m


def _classifier_kernel(x_ref, w_ref, b_ref, o_ref, *, norm_feat):
    """x_ref: [tm, C]; w_ref: [C, tn]; b_ref: [1, tn]; o_ref: [tm, tn]."""
    x = x_ref[...]
    if norm_feat:
        # F.normalize(x, p=2, eps=1e-12): x / max(||x||, 1e-12)
        #   == x * rsqrt(max(||x||^2, 1e-24)).  rsqrt rides the EUP slot.
        xf = x.astype(jnp.float32)
        sq = jnp.sum(xf * xf, axis=-1, keepdims=True)
        x = (xf * lax.rsqrt(jnp.maximum(sq, 1e-24))).astype(x_ref.dtype)
    acc = jnp.dot(x, w_ref[...], preferred_element_type=jnp.float32)
    acc = acc + b_ref[...].astype(jnp.float32)   # broadcast bias over rows
    o_ref[...] = acc.astype(o_ref.dtype)


def fuse_params(weights, biases, *, dtype=None):
    """Pre-fuse the per-head Linear params ONCE (outside the forward path).

    weights: list of [c_i, C] (PyTorch nn.Linear layout)
    biases:  list of [c_i] or None entries (or None)
    returns: (W_fused [C, N_pad], b_fused [1, N_pad], n_out)
             with N_pad = round_up(sum(c_i), 128) (zero-padded, lane-dense).
    """
    n_heads = len(weights)
    if biases is None:
        biases = [None] * n_heads
    n_out = sum(int(w.shape[0]) for w in weights)
    n_pad = _round_up(max(n_out, 1), 128)

    w = jnp.concatenate([wi.T for wi in weights], axis=1)          # [C, N]
    b_parts = []
    for wi, bi in zip(weights, biases):
        if bi is None:
            b_parts.append(jnp.zeros((int(wi.shape[0]),), w.dtype))
        else:
            b_parts.append(bi.astype(w.dtype))
    b = jnp.concatenate(b_parts, axis=0)                            # [N]

    if n_pad != n_out:
        w = jnp.pad(w, ((0, 0), (0, n_pad - n_out)))
        b = jnp.pad(b, (0, n_pad - n_out))
    if dtype is not None:
        w = w.astype(dtype)
        b = b.astype(dtype)
    return w, b[None, :], n_out


def comformer_inc_classifier(x, w_fused, b_fused, n_out, *, norm_feat=False,
                             tm=256, tn=512):
    """Fused incremental classifier forward.

    x:        [B, Q, C]
    w_fused:  [C, N_pad]   (from fuse_params)
    b_fused:  [1, N_pad]
    returns:  [B, Q, n_out]
    """
    B, Q, C = x.shape
    assert w_fused.shape[0] == C, (w_fused.shape, C)
    n_pad = w_fused.shape[1]
    M = B * Q
    xm = x.reshape(M, C)

    # Tile sizes: clamp to the (padded) problem, keep (8, 128) friendly and
    # small enough to double-buffer comfortably inside v7x's 64 MiB VMEM.
    m8 = _round_up(M, 8)
    tm = min(tm, m8)
    m_pad = _round_up(m8, tm)
    tn = min(tn, n_pad)              # n_pad is a multiple of 128, so tn is too
    n_grid = _round_up(n_pad, tn)

    if m_pad != M:
        xm = jnp.pad(xm, ((0, m_pad - M), (0, 0)))
    if n_grid != n_pad:
        w_fused = jnp.pad(w_fused, ((0, 0), (0, n_grid - n_pad)))
        b_fused = jnp.pad(b_fused, ((0, 0), (0, n_grid - n_pad)))
        n_pad = n_grid

    grid = (m_pad // tm, n_pad // tn)
    out = pl.pallas_call(
        functools.partial(_classifier_kernel, norm_feat=norm_feat),
        out_shape=jax.ShapeDtypeStruct((m_pad, n_pad), x.dtype),
        grid_spec=pl.GridSpec(
            grid=grid,
            in_specs=[
                pl.BlockSpec((tm, C), lambda i, j: (i, 0)),    # x row-tile
                pl.BlockSpec((C, tn), lambda i, j: (0, j)),    # W col-tile
                pl.BlockSpec((1, tn), lambda i, j: (0, j)),    # bias col-tile
            ],
            out_specs=pl.BlockSpec((tm, tn), lambda i, j: (i, j)),
        ),
        compiler_params=pltpu.CompilerParams(
            dimension_semantics=("parallel", "parallel")),
    )(xm, w_fused, b_fused)
    return out[:M, :n_out].reshape(B, Q, n_out)


def init_params(key, classes, channels, bias=True):
    """Deterministic nn.Linear-style init (uniform(-1/sqrt(C), 1/sqrt(C)))."""
    weights, biases = [], []
    bound = 1.0 / (channels ** 0.5)
    for c in classes:
        key, kw, kb = jax.random.split(key, 3)
        weights.append(
            jax.random.uniform(kw, (c, channels), jnp.float32, -bound, bound))
        if bias:
            biases.append(
                jax.random.uniform(kb, (c,), jnp.float32, -bound, bound))
        else:
            biases.append(None)
    return weights, biases


if __name__ == "__main__":
    # Small shapes consistent with the module: [B, Q, C] query features.
    classes = [8, 4, 4]          # incremental class heads
    channels = 32
    B, Q = 2, 8

    key = jax.random.PRNGKey(0)
    key, kx, kp = jax.random.split(key, 3)
    x = jax.random.normal(kx, (B, Q, channels), jnp.float32)
    weights, biases = init_params(kp, classes, channels, bias=True)

    # Pre-fuse params once (outside the per-forward path).
    w_fused, b_fused, n_out = fuse_params(weights, biases)

    # --- norm_feat=False (module default) -----------------------------------
    out = comformer_inc_classifier(x, w_fused, b_fused, n_out, norm_feat=False)
    out = jax.block_until_ready(out)
    ref = jnp.concatenate(
        [x @ w.T + b[None, None, :] for w, b in zip(weights, biases)], axis=2)
    assert out.shape == (B, Q, sum(classes)), out.shape
    assert jnp.allclose(out, ref, atol=1e-5, rtol=1e-5), \
        float(jnp.max(jnp.abs(out - ref)))

    # --- norm_feat=True ------------------------------------------------------
    out_n = comformer_inc_classifier(x, w_fused, b_fused, n_out, norm_feat=True)
    out_n = jax.block_until_ready(out_n)
    xn = x / jnp.maximum(
        jnp.sqrt(jnp.sum(x * x, axis=-1, keepdims=True)), 1e-12)
    ref_n = jnp.concatenate(
        [xn @ w.T + b[None, None, :] for w, b in zip(weights, biases)], axis=2)
    assert jnp.allclose(out_n, ref_n, atol=1e-4, rtol=1e-4), \
        float(jnp.max(jnp.abs(out_n - ref_n)))

    print("KERNEL_OK")
</pallas_src>

<mosaic_0001>
module attributes {stable_mosaic.version = 11 : i64} {
  func.func @_classifier_kernel(%arg0: i32, %arg1: i32, %arg2: memref<16x32xf32, #tpu.memory_space<vmem>>, %arg3: memref<32x128xf32, #tpu.memory_space<vmem>>, %arg4: memref<1x128xf32, #tpu.memory_space<vmem>>, %arg5: memref<16x128xf32, #tpu.memory_space<vmem>>) attributes {dimension_semantics = [#tpu.dimension_semantics<parallel>, #tpu.dimension_semantics<parallel>], iteration_bounds = array<i64: 1, 1>, scalar_prefetch = 0 : i64, scratch_operands = 0 : i64, tpu.core_type = #tpu.core_type<tc>, window_params = [{transform_indices = @transform_0, window_bounds = array<i64: 16, 32>}, {transform_indices = @transform_1, window_bounds = array<i64: 32, 128>}, {transform_indices = @transform_2, window_bounds = array<i64: 1, 128>}, {transform_indices = @transform_3, window_bounds = array<i64: 16, 128>}]} {
    %c0 = arith.constant 0 : index
    %c0_0 = arith.constant 0 : index
    %0 = vector.load %arg2[%c0, %c0_0] : memref<16x32xf32, #tpu.memory_space<vmem>>, vector<16x32xf32>
    %c0_1 = arith.constant 0 : index
    %c0_2 = arith.constant 0 : index
    %1 = vector.load %arg3[%c0_1, %c0_2] : memref<32x128xf32, #tpu.memory_space<vmem>>, vector<32x128xf32>
    %cst = arith.constant dense<0.000000e+00> : vector<16x128xf32>
    %2 = tpu.matmul %0, %1, %cst {dimension_numbers = #tpu.dot_dimension_numbers<[1], [0], [0], [1], [0, 0, 1, 1], [], []>} : vector<16x32xf32>, vector<32x128xf32>, vector<16x128xf32> -> vector<16x128xf32>
    %c0_3 = arith.constant 0 : index
    %c0_4 = arith.constant 0 : index
    %3 = vector.load %arg4[%c0_3, %c0_4] : memref<1x128xf32, #tpu.memory_space<vmem>>, vector<1x128xf32>
    %4 = vector.broadcast %3 : vector<1x128xf32> to vector<16x128xf32>
    %5 = arith.addf %2, %4 : vector<16x128xf32>
    %c0_5 = arith.constant 0 : index
    %c0_6 = arith.constant 0 : index
    %6 = vector.load %arg5[%c0_5, %c0_6] : memref<16x128xf32, #tpu.memory_space<vmem>>, vector<16x128xf32>
    tpu.vector_store %arg5[%c0_5, %c0_6], %5 {strides = array<i32>} : memref<16x128xf32, #tpu.memory_space<vmem>>, vector<16x128xf32>,
    return
  }
  func.func @transform_0(%arg0: i32, %arg1: i32) -> (i32, i32) {
    %c0_i32 = arith.constant 0 : i32
    %c0_i32_0 = arith.constant 0 : i32
    return %arg0, %c0_i32 : i32, i32
  }
  func.func @transform_1(%arg0: i32, %arg1: i32) -> (i32, i32) {
    %c0_i32 = arith.constant 0 : i32
    %c0_i32_0 = arith.constant 0 : i32
    return %c0_i32, %arg1 : i32, i32
  }
  func.func @transform_2(%arg0: i32, %arg1: i32) -> (i32, i32) {
    %c0_i32 = arith.constant 0 : i32
    %c0_i32_0 = arith.constant 0 : i32
    return %c0_i32, %arg1 : i32, i32
  }
  func.func @transform_3(%arg0: i32, %arg1: i32) -> (i32, i32) {
    %c0_i32 = arith.constant 0 : i32
    return %arg0, %arg1 : i32, i32
  }
}

</mosaic_0001>

<llo_original>
// kernel: tpu_custom_call.1
$region0: #{tpu_custom_call.1}
  #allocation0 [shape = 'u32[]', space=smem, size = 0x4, offset = 0x4, fixed_abs, tag = 'smem constant byte address 0x4 - core index']
  #allocation1 [shape = 'u32[144,128]{1,0:T(1,128)}', space=vmem, size = 0x12000, scoped, tag = 'internal scratch']
  %s0 = inlined_call_operand.hbm [shape: f32[16,32], index: 0, kind: input, shape index: {}]
  %s1 = inlined_call_operand.hbm [shape: f32[32,128], index: 1, kind: input, shape index: {}]
  %s2 = inlined_call_operand.vmem [shape: f32[1,128], index: 2, kind: input, shape index: {}]
  %s3 = inlined_call_operand.hbm [shape: f32[16,128], index: 3, kind: output, shape index: {}]
  %s4 = sld [smem:[#allocation0]]
  $region30: #{tpu_custom_call.1} parent=0
    _
  %s6 = ssub.s32 1, %s4
  %s7 = scalar_select 0, %s6, %s4
  $region1: #{tpu_custom_call.1} parent=0
    #allocation2 [shape = 'u8[8192]{0}', space=vmem, size = 0x2000, scoped, tag = 'input window, operand 0, single buffered']
    #allocation3 [shape = 's32[1]{0}', space=sflag, size = 0x4, scoped, tag = 'scoped memory for tpu_custom_call.1']
    #allocation4 [shape = 's32[1]{0}', space=sflag, size = 0x4, scoped, tag = 'scoped memory for tpu_custom_call.1']
    #allocation5 [shape = 'u8[16384]{0}', space=vmem, size = 0x4000, scoped, tag = 'input window, operand 1, single buffered']
    #allocation6 [shape = 's32[1]{0}', space=sflag, size = 0x4, scoped, tag = 'scoped memory for tpu_custom_call.1']
    #allocation7 [shape = 'u8[8192]{0}', space=vmem, size = 0x2000, scoped, tag = 'output window, operand 0, single buffered']
    %8 = vsyncpa [#allocation3], 0
    %9 = vsyncpa [#allocation6], 0
    %10 = vsyncpa [#allocation4], 0
    // Predicated region
    $region2: #{tpu_custom_call.1} parent=1 // pred_check
      _
    $region3: #{tpu_custom_call.1} parent=1 // pred_check_branch
      %12 = sbr.rel (0) target = $region5
    $region4: #{tpu_custom_call.1} parent=1 // pred_region
      %s14 = ssub.s32 256, 256
      %15 = vsyncadd [#allocation3], %s14
      %s16 = sshll.u32 [#allocation2], 4
      %s17 = int_to_ptr.vmem [resolvable:$true] %s16
      %22 = dma.hbm_to_vmem [thread:$0]  %s0, 256, %s17, [#allocation3], 128, 128, 8
    $region5: #{tpu_custom_call.1} parent=1 // pred_fallthru
      _
    // Predicated region
    $region6: #{tpu_custom_call.1} parent=1 // pred_check
      _
    $region7: #{tpu_custom_call.1} parent=1 // pred_check_branch
      %24 = sbr.rel (0) target = $region9
    $region8: #{tpu_custom_call.1} parent=1 // pred_region
      %s26 = ssub.s32 512, 512
      %27 = vsyncadd [#allocation6], %s26
      %s28 = sshll.u32 [#allocation5], 4
      %s29 = int_to_ptr.vmem [resolvable:$true] %s28
      %34 = dma.hbm_to_vmem [thread:$0]  %s1, 512, %s29, [#allocation6], 128, 128, 8
    $region9: #{tpu_custom_call.1} parent=1 // pred_fallthru
      _
    // Predicated region
    $region10: #{tpu_custom_call.1} parent=1 // pred_check
      _
    $region11: #{tpu_custom_call.1} parent=1 // pred_check_branch
      %36 = sbr.rel (0) target = $region13
    $region12: #{tpu_custom_call.1} parent=1 // pred_region
      _
    $region13: #{tpu_custom_call.1} parent=1 // pred_fallthru
      _
    // Predicated region
    $region14: #{tpu_custom_call.1} parent=1 // pred_check
      _
    $region15: #{tpu_custom_call.1} parent=1 // pred_check_branch
      %38 = sbr.rel (0) target = $region17
    $region16: #{tpu_custom_call.1} parent=1 // pred_region
      %39 = dma.done [#allocation3], 256
    $region17: #{tpu_custom_call.1} parent=1 // pred_fallthru
      _
    // Predicated region
    $region18: #{tpu_custom_call.1} parent=1 // pred_check
      _
    $region19: #{tpu_custom_call.1} parent=1 // pred_check_branch
      %41 = sbr.rel (0) target = $region21
    $region20: #{tpu_custom_call.1} parent=1 // pred_region
      %42 = dma.done [#allocation6], 512
    $region21: #{tpu_custom_call.1} parent=1 // pred_fallthru
      _
    %v43 = vld [vmem:[#allocation2] sm:$0xff]
    %v44 = vld [vmem:[#allocation2 + $0x8] sm:$0xff]
    %v45 = vld [vmem:[#allocation5] sm:$0xff]
    %v46 = vld [vmem:[#allocation5 + $0x8] sm:$0xff]
    %v47 = vld [vmem:[#allocation5 + $0x10] sm:$0xff]
    %v48 = vld [vmem:[#allocation5 + $0x18] sm:$0xff]
    %v49 = vld [vmem:[%s2] sm:$0x1]
    %v51 = vlaneseq
    %v52 = vshrl.u32 %v51, 7
    %v53 = vsub.s32 0, %v52
    %v54 = vrot.slane %v49, %v53
    %vm56 = vcmask 261120
    %v58 = vsel %vm56, %v43, 0
    %v61 = vsel %vm56, %v44, 0
    %63 = vmatprep.subr.mxu0 0.0
    %64 = vmatpush1.msra.mxu0 %v45
    %65 = vmatprep.subr.mxu0 0.0
    %66 = vmatpush1.msra.mxu0 %v46
    %67 = vmatprep.subr.mxu0 0.0
    %68 = vmatpush1.msra.mxu0 %v47
    %69 = vmatprep.subr.mxu0 0.0
    %70 = vmatpush1.msra.mxu0 %v48
    %71 = vmatprep.subr.mxu0 0.0
    %72 = vmatpush1.msra.mxu0 0.0
    %73 = vmatprep.subr.mxu0 0.0
    %74 = vmatpush1.msra.mxu0 0.0
    %75 = vmatprep.subr.mxu0 0.0
    %76 = vmatpush1.msra.mxu0 0.0
    %77 = vmatprep.subr.mxu0 0.0
    %78 = vmatpush1.msra.mxu0 0.0
    %79 = vmatprep.subr.mxu0 0.0
    %80 = vmatpush1.msra.mxu0 0.0
    %81 = vmatprep.subr.mxu0 0.0
    %82 = vmatpush1.msra.mxu0 0.0
    %83 = vmatprep.subr.mxu0 0.0
    %84 = vmatpush1.msra.mxu0 0.0
    %85 = vmatprep.subr.mxu0 0.0
    %86 = vmatpush1.msra.mxu0 0.0
    %87 = vmatprep.subr.mxu0 0.0
    %88 = vmatpush1.msra.mxu0 0.0
    %89 = vmatprep.subr.mxu0 0.0
    %90 = vmatpush1.msra.mxu0 0.0
    %91 = vmatprep.subr.mxu0 0.0
    %92 = vmatpush1.msra.mxu0 0.0
    %93 = vmatprep.subr.mxu0 0.0
    %94 = vmatpush1.msra.mxu0 0.0
    %95 = vmatprep.subr.mxu0 0.0
    %96 = vmatpush1.msra.mxu0 0.0
    %97 = vmatprep.subr.mxu0 0.0
    %98 = vmatpush1.msra.mxu0 0.0
    %99 = vmatprep.subr.mxu0 0.0
    %100 = vmatpush1.msra.mxu0 0.0
    %101 = vmatprep.subr.mxu0 0.0
    %102 = vmatpush1.msra.mxu0 0.0
    %103 = vmatprep.subr.mxu0 0.0
    %104 = vmatpush1.msra.mxu0 0.0
    %105 = vmatprep.subr.mxu0 0.0
    %106 = vmatpush1.msra.mxu0 0.0
    %107 = vmatprep.subr.mxu0 0.0
    %108 = vmatpush1.msra.mxu0 0.0
    %109 = vmatprep.subr.mxu0 0.0
    %110 = vmatpush1.msra.mxu0 0.0
    %111 = vmatprep.subr.mxu0 0.0
    %112 = vmatpush1.msra.mxu0 0.0
    %113 = vmatprep.subr.mxu0 0.0
    %114 = vmatpush1.msra.mxu0 0.0
    %115 = vmatprep.subr.mxu0 0.0
    %116 = vmatpush1.msra.mxu0 0.0
    %117 = vmatprep.subr.mxu0 0.0
    %118 = vmatpush1.msra.mxu0 0.0
    %119 = vmatprep.subr.mxu0 0.0
    %120 = vmatpush1.msra.mxu0 0.0
    %121 = vmatprep.subr.mxu0 0.0
    %122 = vmatpush1.msra.mxu0 0.0
    %123 = vmatprep.subr.mxu0 0.0
    %124 = vmatpush1.msra.mxu0 0.0
    %125 = vmatprep.subr.mxu0 0.0
    %126 = vmatpush1.msra.mxu0 0.0
    %127 = vmatprep.mubr.f32.mxu0 0.0
    %128 = vmatmul.mubr.f32.gmra.mrb[0].mxu0 %v58
    %v129 = vpop.f32.mrb[0].mxu0
    %v130 = vadd.f32 %v54, %v129
    %v131 = vpop.f32.mrb[0].mxu0
    %132 = vmatprep.mubr.f32.mxu0 0.0
    %133 = vmatmul.mubr.f32.gmra.mrb[0].mxu0 %v61
    %v134 = vpop.f32.mrb[0].mxu0
    %v135 = vadd.f32 %v54, %v134
    %v136 = vpop.f32.mrb[0].mxu0
    %137 = vdwg.mxu0
    %138 = vst [vmem:[#allocation7] sm:$0xff] %v130
    %139 = vst [vmem:[#allocation7 + $0x8] sm:$0xff] %v135
    // Predicated region
    $region22: #{tpu_custom_call.1} parent=1 // pred_check
      _
    $region23: #{tpu_custom_call.1} parent=1 // pred_check_branch
      %141 = sbr.rel (0) target = $region25
    $region24: #{tpu_custom_call.1} parent=1 // pred_region
      %s143 = ssub.s32 256, 256
      %144 = vsyncadd [#allocation4], %s143
      %s145 = sshll.u32 [#allocation7], 4
      %s146 = int_to_ptr.vmem [resolvable:$true] %s145
      %151 = dma.vmem_to_hbm [thread:$0]  %s146, 256, %s3, [#allocation4], 128, 128, 8
    $region25: #{tpu_custom_call.1} parent=1 // pred_fallthru
      _
    // Predicated region
    $region26: #{tpu_custom_call.1} parent=1 // pred_check
      _
    $region27: #{tpu_custom_call.1} parent=1 // pred_check_branch
      %153 = sbr.rel (0) target = $region29
    $region28: #{tpu_custom_call.1} parent=1 // pred_region
      %154 = dma.done [#allocation4], 256
    $region29: #{tpu_custom_call.1} parent=1 // pred_fallthru
      _
    %155 = vsyncpa [#allocation3], 1
    %156 = vsyncpa [#allocation6], 1
    %157 = vsyncpa [#allocation4], 1

</llo_original>
